<compile_context>
chip_gen: v5e
topology: v5e:2x2
jax: 0.10.0
libtpu: 0.0.40
codegen_flags: <defaults>
</compile_context>

<pallas_src>
import jax
import jax.numpy as jnp
from jax.experimental import pallas as pl
from jax.experimental.pallas import tpu as pltpu


def critic_kernel(s_ref, a_ref, w1s_ref, w1a_ref, b1_ref, w2_ref, b2_ref,
                  w3_ref, b3_ref, o_ref):
    # Transposed (batch-on-lanes) layout:
    #   s_ref:  (S, Bt)      a_ref:  (1, Bt)
    #   w1s:    (H, S)       w1a:    (H, 1)     b1: (H, 1)
    #   w2:     (H, H)       b2:     (H, 1)
    #   w3:     (1, H)       b3:     (1, 1)
    #   o_ref:  (1, Bt)
    s = s_ref[...]
    a = a_ref[...]

    # Layer 1 with the concat fused in:
    #   h1 = W1[:, :S] @ s + W1[:, S:] * a + b1
    # K is only 3+1, so a VPU broadcast-MAC beats driving the MXU.
    h1 = w1a_ref[...] * a + b1_ref[...]                       # (H, Bt)
    for f in range(s_ref.shape[0]):                           # S = 3, unrolled
        h1 = h1 + w1s_ref[:, f:f + 1] * s[f:f + 1, :]
    h1 = jnp.maximum(h1, 0.0)

    # Layer 2: (H,H) @ (H,Bt) with f32 accumulation.
    h2 = jnp.dot(w2_ref[...], h1, preferred_element_type=jnp.float32)
    h2 = jnp.maximum(h2 + b2_ref[...], 0.0)

    # Layer 3: (1,H) @ (H,Bt) -> (1,Bt); lane-dense, unmasked stores.
    q = jnp.dot(w3_ref[...], h2, preferred_element_type=jnp.float32)
    o_ref[...] = (q + b3_ref[...]).astype(o_ref.dtype)


def critic_forward(state, action, params, *, block_b=4096):
    """state: (B, 3), action: (B, 1) -> q: (B, 1). Mirrors Critic.forward."""
    # @to_torch casts everything to float32.
    state = jnp.asarray(state, jnp.float32)
    action = jnp.asarray(action, jnp.float32)
    w1, b1, w2, b2, w3, b3 = params                # PyTorch layout: w (out,in), b (out,1)

    B, S = state.shape
    assert block_b % 128 == 0

    # Lane-dense layout: batch on the last (128-lane) axis.
    state_t = state.T                              # (S, B)  real transpose (fused w/ cast)
    action_t = action.T                            # (1, B)  pure reshape, no data movement

    # Split W1 so the concat([state, action]) happens inside the kernel.
    w1s = w1[:, :S]                                # (16, S)
    w1a = w1[:, S:]                                # (16, 1)

    if B <= block_b:
        block, grid_b, Bp = B, 1, B                # full-extent block: no alignment needed
    else:
        block = block_b                            # multiple of 128
        grid_b = pl.cdiv(B, block)
        Bp = grid_b * block
        pad = Bp - B
        state_t = jnp.pad(state_t, ((0, 0), (0, pad)))
        action_t = jnp.pad(action_t, ((0, 0), (0, pad)))

    batch_spec = lambda i: (0, i)
    const_spec = lambda i: (0, 0)                  # weights stay resident across grid steps

    q_t = pl.pallas_call(
        critic_kernel,
        out_shape=jax.ShapeDtypeStruct((1, Bp), jnp.float32),
        grid=(grid_b,),
        in_specs=[
            pl.BlockSpec((S, block), batch_spec),
            pl.BlockSpec((1, block), batch_spec),
            pl.BlockSpec(w1s.shape, const_spec),
            pl.BlockSpec(w1a.shape, const_spec),
            pl.BlockSpec(b1.shape, const_spec),
            pl.BlockSpec(w2.shape, const_spec),
            pl.BlockSpec(b2.shape, const_spec),
            pl.BlockSpec(w3.shape, const_spec),
            pl.BlockSpec(b3.shape, const_spec),
        ],
        out_specs=pl.BlockSpec((1, block), batch_spec),
        compiler_params=pltpu.CompilerParams(
            dimension_semantics=("parallel",),     # lets v7x shard batch over both TCs
        ),
    )(state_t, action_t, w1s, w1a, b1, w2, b2, w3, b3)

    # (1, B) -> (B, 1): transpose of a single-row array is a pure reshape.
    return q_t[:, :B].T


def init_critic_params(key):
    """nn.Linear default init U(-1/sqrt(fan_in), +1/sqrt(fan_in)); PyTorch (out,in) layout."""
    def linear(key, fan_in, fan_out):
        kw, kb = jax.random.split(key)
        bound = 1.0 / jnp.sqrt(float(fan_in))
        w = jax.random.uniform(kw, (fan_out, fan_in), jnp.float32, -bound, bound)
        b = jax.random.uniform(kb, (fan_out, 1), jnp.float32, -bound, bound)
        return w, b

    k1, k2, k3 = jax.random.split(key, 3)
    w1, b1 = linear(k1, 4, 16)
    w2, b2 = linear(k2, 16, 16)
    w3, b3 = linear(k3, 16, 1)
    return (w1, b1, w2, b2, w3, b3)


def critic_ref(state, action, params):
    """Pure-JAX reference for correctness check."""
    w1, b1, w2, b2, w3, b3 = params
    cat = jnp.concatenate([state, action], axis=-1)
    h1 = jnp.maximum(cat @ w1.T + b1.T, 0.0)
    h2 = jnp.maximum(h1 @ w2.T + b2.T, 0.0)
    return h2 @ w3.T + b3.T


if __name__ == "__main__":
    key = jax.random.PRNGKey(0)
    kp, ks, ka = jax.random.split(key, 3)

    params = init_critic_params(kp)

    # Small single-tile path (Pendulum-v0: obs dim 3, act dim 1).
    B = 8
    state = jax.random.normal(ks, (B, 3), jnp.float32)
    action = jax.random.normal(ka, (B, 1), jnp.float32)

    q = jax.block_until_ready(critic_forward(state, action, params))
    q_ref = critic_ref(state, action, params)
    assert q.shape == (B, 1)
    assert jnp.allclose(q, q_ref, atol=1e-5, rtol=1e-4), "mismatch vs reference (B=8)"

    # Gridded + padded path: multiple lane-dense batch tiles with resident weights.
    B2 = 300
    state2 = jax.random.normal(ks, (B2, 3), jnp.float32)
    action2 = jax.random.normal(ka, (B2, 1), jnp.float32)
    q2 = jax.block_until_ready(critic_forward(state2, action2, params, block_b=128))
    q2_ref = critic_ref(state2, action2, params)
    assert q2.shape == (B2, 1)
    assert jnp.allclose(q2, q2_ref, atol=1e-5, rtol=1e-4), "mismatch vs reference (B=300)"

    print("KERNEL_OK")
</pallas_src>

<mosaic_0001>
module attributes {stable_mosaic.version = 11 : i64} {
  func.func @critic_kernel(%arg0: i32, %arg1: memref<3x8xf32, #tpu.memory_space<vmem>>, %arg2: memref<1x8xf32, #tpu.memory_space<vmem>>, %arg3: memref<16x3xf32, #tpu.memory_space<vmem>>, %arg4: memref<16x1xf32, #tpu.memory_space<vmem>>, %arg5: memref<16x1xf32, #tpu.memory_space<vmem>>, %arg6: memref<16x16xf32, #tpu.memory_space<vmem>>, %arg7: memref<16x1xf32, #tpu.memory_space<vmem>>, %arg8: memref<1x16xf32, #tpu.memory_space<vmem>>, %arg9: memref<1x1xf32, #tpu.memory_space<vmem>>, %arg10: memref<1x8xf32, #tpu.memory_space<vmem>>) attributes {dimension_semantics = [#tpu.dimension_semantics<parallel>], iteration_bounds = array<i64: 1>, scalar_prefetch = 0 : i64, scratch_operands = 0 : i64, tpu.core_type = #tpu.core_type<tc>, window_params = [{transform_indices = @transform_0, window_bounds = array<i64: 3, 8>}, {transform_indices = @transform_1, window_bounds = array<i64: 1, 8>}, {pipeline_mode = #tpu.pipeline_mode<synchronous>, transform_indices = @transform_2, window_bounds = array<i64: 16, 3>}, {pipeline_mode = #tpu.pipeline_mode<synchronous>, transform_indices = @transform_3, window_bounds = array<i64: 16, 1>}, {pipeline_mode = #tpu.pipeline_mode<synchronous>, transform_indices = @transform_4, window_bounds = array<i64: 16, 1>}, {pipeline_mode = #tpu.pipeline_mode<synchronous>, transform_indices = @transform_5, window_bounds = array<i64: 16, 16>}, {pipeline_mode = #tpu.pipeline_mode<synchronous>, transform_indices = @transform_6, window_bounds = array<i64: 16, 1>}, {pipeline_mode = #tpu.pipeline_mode<synchronous>, transform_indices = @transform_7, window_bounds = array<i64: 1, 16>}, {pipeline_mode = #tpu.pipeline_mode<synchronous>, transform_indices = @transform_8, window_bounds = array<i64: 1, 1>}, {transform_indices = @transform_9, window_bounds = array<i64: 1, 8>}]} {
    %c0 = arith.constant 0 : index
    %c0_0 = arith.constant 0 : index
    %0 = vector.load %arg1[%c0, %c0_0] : memref<3x8xf32, #tpu.memory_space<vmem>>, vector<3x8xf32>
    %c0_1 = arith.constant 0 : index
    %c0_2 = arith.constant 0 : index
    %1 = vector.load %arg2[%c0_1, %c0_2] : memref<1x8xf32, #tpu.memory_space<vmem>>, vector<1x8xf32>
    %c0_3 = arith.constant 0 : index
    %c0_4 = arith.constant 0 : index
    %2 = vector.load %arg4[%c0_3, %c0_4] : memref<16x1xf32, #tpu.memory_space<vmem>>, vector<16x1xf32>
    %3 = vector.broadcast %2 : vector<16x1xf32> to vector<16x8xf32>
    %4 = vector.broadcast %1 : vector<1x8xf32> to vector<16x8xf32>
    %5 = arith.mulf %3, %4 : vector<16x8xf32>
    %c0_5 = arith.constant 0 : index
    %c0_6 = arith.constant 0 : index
    %6 = vector.load %arg5[%c0_5, %c0_6] : memref<16x1xf32, #tpu.memory_space<vmem>>, vector<16x1xf32>
    %7 = vector.broadcast %6 : vector<16x1xf32> to vector<16x8xf32>
    %8 = arith.addf %5, %7 : vector<16x8xf32>
    %c0_7 = arith.constant 0 : index
    %c0_8 = arith.constant 0 : index
    %9 = vector.load %arg3[%c0_7, %c0_8] : memref<16x3xf32, #tpu.memory_space<vmem>>, vector<16x1xf32>
    %10 = vector.extract_strided_slice %0 {offsets = [0, 0], sizes = [1, 8], strides = [1, 1]} : vector<3x8xf32> to vector<1x8xf32>
    %11 = vector.broadcast %9 : vector<16x1xf32> to vector<16x8xf32>
    %12 = vector.broadcast %10 : vector<1x8xf32> to vector<16x8xf32>
    %13 = arith.mulf %11, %12 : vector<16x8xf32>
    %14 = arith.addf %8, %13 : vector<16x8xf32>
    %c0_9 = arith.constant 0 : index
    %c1 = arith.constant 1 : index
    %15 = vector.load %arg3[%c0_9, %c1] : memref<16x3xf32, #tpu.memory_space<vmem>>, vector<16x1xf32>
    %16 = vector.extract_strided_slice %0 {offsets = [1, 0], sizes = [1, 8], strides = [1, 1]} : vector<3x8xf32> to vector<1x8xf32>
    %17 = vector.broadcast %15 : vector<16x1xf32> to vector<16x8xf32>
    %18 = vector.broadcast %16 : vector<1x8xf32> to vector<16x8xf32>
    %19 = arith.mulf %17, %18 : vector<16x8xf32>
    %20 = arith.addf %14, %19 : vector<16x8xf32>
    %c0_10 = arith.constant 0 : index
    %c2 = arith.constant 2 : index
    %21 = vector.load %arg3[%c0_10, %c2] : memref<16x3xf32, #tpu.memory_space<vmem>>, vector<16x1xf32>
    %22 = vector.extract_strided_slice %0 {offsets = [2, 0], sizes = [1, 8], strides = [1, 1]} : vector<3x8xf32> to vector<1x8xf32>
    %23 = vector.broadcast %21 : vector<16x1xf32> to vector<16x8xf32>
    %24 = vector.broadcast %22 : vector<1x8xf32> to vector<16x8xf32>
    %25 = arith.mulf %23, %24 : vector<16x8xf32>
    %26 = arith.addf %20, %25 : vector<16x8xf32>
    %cst = arith.constant 0.000000e+00 : f32
    %27 = vector.broadcast %cst : f32 to vector<16x8xf32>
    %28 = arith.maximumf %26, %27 : vector<16x8xf32>
    %c0_11 = arith.constant 0 : index
    %c0_12 = arith.constant 0 : index
    %29 = vector.load %arg6[%c0_11, %c0_12] : memref<16x16xf32, #tpu.memory_space<vmem>>, vector<16x16xf32>
    %cst_13 = arith.constant dense<0.000000e+00> : vector<16x8xf32>
    %30 = tpu.matmul %29, %28, %cst_13 {dimension_numbers = #tpu.dot_dimension_numbers<[1], [0], [0], [1], [0, 0, 1, 1], [], []>} : vector<16x16xf32>, vector<16x8xf32>, vector<16x8xf32> -> vector<16x8xf32>
    %c0_14 = arith.constant 0 : index
    %c0_15 = arith.constant 0 : index
    %31 = vector.load %arg7[%c0_14, %c0_15] : memref<16x1xf32, #tpu.memory_space<vmem>>, vector<16x1xf32>
    %32 = vector.broadcast %31 : vector<16x1xf32> to vector<16x8xf32>
    %33 = arith.addf %30, %32 : vector<16x8xf32>
    %cst_16 = arith.constant 0.000000e+00 : f32
    %34 = vector.broadcast %cst_16 : f32 to vector<16x8xf32>
    %35 = arith.maximumf %33, %34 : vector<16x8xf32>
    %c0_17 = arith.constant 0 : index
    %c0_18 = arith.constant 0 : index
    %36 = vector.load %arg8[%c0_17, %c0_18] : memref<1x16xf32, #tpu.memory_space<vmem>>, vector<1x16xf32>
    %cst_19 = arith.constant dense<0.000000e+00> : vector<1x8xf32>
    %37 = tpu.matmul %36, %35, %cst_19 {dimension_numbers = #tpu.dot_dimension_numbers<[1], [0], [0], [1], [0, 0, 1, 1], [], []>} : vector<1x16xf32>, vector<16x8xf32>, vector<1x8xf32> -> vector<1x8xf32>
    %c0_20 = arith.constant 0 : index
    %c0_21 = arith.constant 0 : index
    %38 = vector.load %arg9[%c0_20, %c0_21] : memref<1x1xf32, #tpu.memory_space<vmem>>, vector<1x1xf32>
    %39 = vector.broadcast %38 : vector<1x1xf32> to vector<1x8xf32>
    %40 = arith.addf %37, %39 : vector<1x8xf32>
    %c0_22 = arith.constant 0 : index
    %c0_23 = arith.constant 0 : index
    %41 = vector.load %arg10[%c0_22, %c0_23] : memref<1x8xf32, #tpu.memory_space<vmem>>, vector<1x8xf32>
    tpu.vector_store %arg10[%c0_22, %c0_23], %40 {strides = array<i32>} : memref<1x8xf32, #tpu.memory_space<vmem>>, vector<1x8xf32>,
    return
  }
  func.func @transform_0(%arg0: i32) -> (i32, i32) {
    %c0_i32 = arith.constant 0 : i32
    %c0_i32_0 = arith.constant 0 : i32
    return %c0_i32, %arg0 : i32, i32
  }
  func.func @transform_1(%arg0: i32) -> (i32, i32) {
    %c0_i32 = arith.constant 0 : i32
    %c0_i32_0 = arith.constant 0 : i32
    return %c0_i32, %arg0 : i32, i32
  }
  func.func @transform_2(%arg0: i32) -> (i32, i32) {
    %c0_i32 = arith.constant 0 : i32
    %c0_i32_0 = arith.constant 0 : i32
    %c0_i32_1 = arith.constant 0 : i32
    return %c0_i32, %c0_i32_0 : i32, i32
  }
  func.func @transform_3(%arg0: i32) -> (i32, i32) {
    %c0_i32 = arith.constant 0 : i32
    %c0_i32_0 = arith.constant 0 : i32
    %c0_i32_1 = arith.constant 0 : i32
    return %c0_i32, %c0_i32_0 : i32, i32
  }
  func.func @transform_4(%arg0: i32) -> (i32, i32) {
    %c0_i32 = arith.constant 0 : i32
    %c0_i32_0 = arith.constant 0 : i32
    %c0_i32_1 = arith.constant 0 : i32
    return %c0_i32, %c0_i32_0 : i32, i32
  }
  func.func @transform_5(%arg0: i32) -> (i32, i32) {
    %c0_i32 = arith.constant 0 : i32
    %c0_i32_0 = arith.constant 0 : i32
    %c0_i32_1 = arith.constant 0 : i32
    return %c0_i32, %c0_i32_0 : i32, i32
  }
  func.func @transform_6(%arg0: i32) -> (i32, i32) {
    %c0_i32 = arith.constant 0 : i32
    %c0_i32_0 = arith.constant 0 : i32
    %c0_i32_1 = arith.constant 0 : i32
    return %c0_i32, %c0_i32_0 : i32, i32
  }
  func.func @transform_7(%arg0: i32) -> (i32, i32) {
    %c0_i32 = arith.constant 0 : i32
    %c0_i32_0 = arith.constant 0 : i32
    %c0_i32_1 = arith.constant 0 : i32
    return %c0_i32, %c0_i32_0 : i32, i32
  }
  func.func @transform_8(%arg0: i32) -> (i32, i32) {
    %c0_i32 = arith.constant 0 : i32
    %c0_i32_0 = arith.constant 0 : i32
    %c0_i32_1 = arith.constant 0 : i32
    return %c0_i32, %c0_i32_0 : i32, i32
  }
  func.func @transform_9(%arg0: i32) -> (i32, i32) {
    %c0_i32 = arith.constant 0 : i32
    %c0_i32_0 = arith.constant 0 : i32
    return %c0_i32, %arg0 : i32, i32
  }
}

</mosaic_0001>

<llo_original>
// kernel: tpu_custom_call.1
$region0: #{tpu_custom_call.1}
  #allocation0 [shape = 'u32[]', space=smem, size = 0x4, offset = 0x4, fixed_abs, tag = 'smem constant byte address 0x4 - core index']
  #allocation1 [shape = 'u32[72,128]{1,0:T(1,128)}', space=vmem, size = 0x9000, scoped, tag = 'internal scratch']
  #allocation2 [shape = 'f32[1,1]{1,0:T(1,128)S(1)}', space=vmem, size = 0x200, scoped, tag = 'scoped memory for tpu_custom_call.1']
  %s0 = inlined_call_operand.vmem [shape: f32[3,8], index: 0, kind: input, shape index: {}]
  %s1 = inlined_call_operand.vmem [shape: f32[1,8], index: 1, kind: input, shape index: {}]
  %s2 = inlined_call_operand.vmem [shape: f32[16,3], index: 2, kind: input, shape index: {}]
  %s3 = inlined_call_operand.vmem [shape: f32[16,1], index: 3, kind: input, shape index: {}]
  %s4 = inlined_call_operand.vmem [shape: f32[16,1], index: 4, kind: input, shape index: {}]
  %s5 = inlined_call_operand.vmem [shape: f32[16,16], index: 5, kind: input, shape index: {}]
  %s6 = inlined_call_operand.vmem [shape: f32[16,1], index: 6, kind: input, shape index: {}]
  %s7 = inlined_call_operand.vmem [shape: f32[1,16], index: 7, kind: input, shape index: {}]
  %s8 = inlined_call_operand.<no memory space> [shape: f32[1,1], index: 8, kind: input, shape index: {}]
  %s9 = inlined_call_operand.hbm [shape: f32[1,8], index: 9, kind: output, shape index: {}]
  %s10 = sld [smem:[#allocation0]]
  $region46: #{tpu_custom_call.1} parent=0
    _
  %s12 = ssub.s32 1, %s10
  %s13 = scalar_select 0, %s12, %s10
  %v14 = vstv %s8
  %15 = vst [vmem:[#allocation2] sm:$0x1] %v14
  $region1: #{tpu_custom_call.1} parent=0
    #allocation3 [shape = 'u8[512]{0}', space=vmem, size = 0x400, scoped, tag = 'output window, operand 0, single buffered']
    #allocation4 [shape = 's32[1]{0}', space=sflag, size = 0x4, scoped, tag = 'scoped memory for tpu_custom_call.1']
    %16 = vsyncpa [#allocation4], 0
    // Predicated region
    $region2: #{tpu_custom_call.1} parent=1 // pred_check
      _
    $region3: #{tpu_custom_call.1} parent=1 // pred_check_branch
      %18 = sbr.rel (0) target = $region5
    $region4: #{tpu_custom_call.1} parent=1 // pred_region
      _
    $region5: #{tpu_custom_call.1} parent=1 // pred_fallthru
      _
    // Predicated region
    $region6: #{tpu_custom_call.1} parent=1 // pred_check
      _
    $region7: #{tpu_custom_call.1} parent=1 // pred_check_branch
      %20 = sbr.rel (0) target = $region9
    $region8: #{tpu_custom_call.1} parent=1 // pred_region
      _
    $region9: #{tpu_custom_call.1} parent=1 // pred_fallthru
      _
    // Predicated region
    $region10: #{tpu_custom_call.1} parent=1 // pred_check
      _
    $region11: #{tpu_custom_call.1} parent=1 // pred_check_branch
      %22 = sbr.rel (0) target = $region13
    $region12: #{tpu_custom_call.1} parent=1 // pred_region
      _
    $region13: #{tpu_custom_call.1} parent=1 // pred_fallthru
      _
    // Predicated region
    $region14: #{tpu_custom_call.1} parent=1 // pred_check
      _
    $region15: #{tpu_custom_call.1} parent=1 // pred_check_branch
      %24 = sbr.rel (0) target = $region17
    $region16: #{tpu_custom_call.1} parent=1 // pred_region
      _
    $region17: #{tpu_custom_call.1} parent=1 // pred_fallthru
      _
    // Predicated region
    $region18: #{tpu_custom_call.1} parent=1 // pred_check
      _
    $region19: #{tpu_custom_call.1} parent=1 // pred_check_branch
      %26 = sbr.rel (0) target = $region21
    $region20: #{tpu_custom_call.1} parent=1 // pred_region
      _
    $region21: #{tpu_custom_call.1} parent=1 // pred_fallthru
      _
    // Predicated region
    $region22: #{tpu_custom_call.1} parent=1 // pred_check
      _
    $region23: #{tpu_custom_call.1} parent=1 // pred_check_branch
      %28 = sbr.rel (0) target = $region25
    $region24: #{tpu_custom_call.1} parent=1 // pred_region
      _
    $region25: #{tpu_custom_call.1} parent=1 // pred_fallthru
      _
    // Predicated region
    $region26: #{tpu_custom_call.1} parent=1 // pred_check
      _
    $region27: #{tpu_custom_call.1} parent=1 // pred_check_branch
      %30 = sbr.rel (0) target = $region29
    $region28: #{tpu_custom_call.1} parent=1 // pred_region
      _
    $region29: #{tpu_custom_call.1} parent=1 // pred_fallthru
      _
    // Predicated region
    $region30: #{tpu_custom_call.1} parent=1 // pred_check
      _
    $region31: #{tpu_custom_call.1} parent=1 // pred_check_branch
      %32 = sbr.rel (0) target = $region33
    $region32: #{tpu_custom_call.1} parent=1 // pred_region
      _
    $region33: #{tpu_custom_call.1} parent=1 // pred_fallthru
      _
    // Predicated region
    $region34: #{tpu_custom_call.1} parent=1 // pred_check
      _
    $region35: #{tpu_custom_call.1} parent=1 // pred_check_branch
      %34 = sbr.rel (0) target = $region37
    $region36: #{tpu_custom_call.1} parent=1 // pred_region
      _
    $region37: #{tpu_custom_call.1} parent=1 // pred_fallthru
      _
    %v35 = vld [vmem:[%s0] sm:$0x7]
    %v36 = vld [vmem:[%s1] sm:$0x1]
    %v37 = vld [vmem:[%s3] sm:$0xff]
    %v38 = vld [vmem:[%s3 + $0x8] sm:$0xff]
    %40 = vset.pattern.permute.xlu0 0
    %41 = vperm.xlu0 %40, %v37
    %v42 = vpop.permute.xlu0 %41
    %45 = vset.pattern.permute.xlu0 0
    %46 = vperm.xlu0 %45, %v38
    %v47 = vpop.permute.xlu0 %46
    %v50 = vperm.slane %v36, 0
    %v52 = vmul.f32 %v42, %v50
    %v53 = vmul.f32 %v47, %v50
    %v54 = vld [vmem:[%s4] sm:$0xff]
    %v55 = vld [vmem:[%s4 + $0x8] sm:$0xff]
    %57 = vset.pattern.permute.xlu0 0
    %58 = vperm.xlu0 %57, %v54
    %v59 = vpop.permute.xlu0 %58
    %62 = vset.pattern.permute.xlu0 0
    %63 = vperm.xlu0 %62, %v55
    %v64 = vpop.permute.xlu0 %63
    %v66 = vadd.f32 %v52, %v59
    %v67 = vadd.f32 %v53, %v64
    %v68 = vld [vmem:[%s2] sm:$0xff]
    %v69 = vld [vmem:[%s2 + $0x8] sm:$0xff]
    %71 = vset.pattern.permute.xlu0 0
    %72 = vperm.xlu0 %71, %v68
    %v73 = vpop.permute.xlu0 %72
    %76 = vset.pattern.permute.xlu0 0
    %77 = vperm.xlu0 %76, %v69
    %v78 = vpop.permute.xlu0 %77
    %v80 = vperm.slane %v35, 0
    %v81 = vmul.f32 %v73, %v80
    %v82 = vmul.f32 %v78, %v80
    %v83 = vadd.f32 %v66, %v81
    %v84 = vadd.f32 %v67, %v82
    %85 = vset.pattern.permute.xlu0 1
    %86 = vperm.xlu0 %85, %v68
    %v87 = vpop.permute.xlu0 %86
    %89 = vset.pattern.permute.xlu0 1
    %90 = vperm.xlu0 %89, %v69
    %v91 = vpop.permute.xlu0 %90
    %v93 = vperm.slane %v35, 1
    %v94 = vmul.f32 %v87, %v93
    %v95 = vmul.f32 %v91, %v93
    %v96 = vadd.f32 %v83, %v94
    %v97 = vadd.f32 %v84, %v95
    %98 = vset.pattern.permute.xlu0 2
    %99 = vperm.xlu0 %98, %v68
    %v100 = vpop.permute.xlu0 %99
    %102 = vset.pattern.permute.xlu0 2
    %103 = vperm.xlu0 %102, %v69
    %v104 = vpop.permute.xlu0 %103
    %v106 = vperm.slane %v35, 2
    %v107 = vmul.f32 %v100, %v106
    %v108 = vmul.f32 %v104, %v106
    %v109 = vadd.f32 %v96, %v107
    %v110 = vadd.f32 %v97, %v108
    %v111 = vmax.f32 %v109, 0.0
    %v112 = vmax.f32 %v110, 0.0
    %v113 = vld [vmem:[%s5] sm:$0xff]
    %v114 = vld [vmem:[%s5 + $0x8] sm:$0xff]
    %v115 = vld [vmem:[%s6] sm:$0xff]
    %v116 = vld [vmem:[%s6 + $0x8] sm:$0xff]
    %118 = vset.pattern.permute.xlu0 0
    %119 = vperm.xlu0 %118, %v115
    %v120 = vpop.permute.xlu0 %119
    %123 = vset.pattern.permute.xlu0 0
    %124 = vperm.xlu0 %123, %v116
    %v125 = vpop.permute.xlu0 %124
    %vm127 = vcmask 130048
    %v129 = vsel %vm127, %v113, 0
    %v132 = vsel %vm127, %v114, 0
    %134 = vmatpush.msra.mxu0 0.0
    %135 = vmatpush.msra.mxu0 0.0
    %136 = vmatpush.msra.mxu0 0.0
    %137 = vmatpush.msra.mxu0 0.0
    %138 = vmatpush.msra.mxu0 0.0
    %139 = vmatpush.msra.mxu0 0.0
    %140 = vmatpush.msra.mxu0 0.0
    %141 = vmatpush.msra.mxu0 0.0
    %142 = vmatpush.msra.mxu0 0.0
    %143 = vmatpush.msra.mxu0 0.0
    %144 = vmatpush.msra.mxu0 0.0
    %145 = vmatpush.msra.mxu0 0.0
    %146 = vmatpush.msra.mxu0 0.0
    %147 = vmatpush.msra.mxu0 0.0
    %148 = vmatpush.msra.mxu0 %v112
    %149 = vmatpush.msra.mxu0 %v111
    %150 = vmatmul.f32.gmra.mxu0 %v129
    %v151 = vpop.f32.mrf.mxu0
    %v152 = vadd.f32 %v120, %v151
    %153 = vmatmul.f32.gmra.mxu0 %v132
    %v154 = vpop.f32.mrf.mxu0
    %v155 = vadd.f32 %v125, %v154
    %156 = vdwg.mxu0
    %v157 = vmax.f32 %v152, 0.0
    %v158 = vmax.f32 %v155, 0.0
    %v159 = vld [vmem:[%s7] sm:$0x1]
    %v160 = vld [vmem:[#allocation2] sm:$0x1]
    %162 = vset.pattern.permute.xlu0 0
    %163 = vperm.xlu0 %162, %v160
    %v164 = vpop.permute.xlu0 %163
    %v166 = vperm.slane %v164, 0
    %v168 = vsel %vm127, %v159, 0
    %170 = vmatpush.msra.mxu0 0.0
    %171 = vmatpush.msra.mxu0 0.0
    %172 = vmatpush.msra.mxu0 0.0
    %173 = vmatpush.msra.mxu0 0.0
    %174 = vmatpush.msra.mxu0 0.0
    %175 = vmatpush.msra.mxu0 0.0
    %176 = vmatpush.msra.mxu0 0.0
    %177 = vmatpush.msra.mxu0 0.0
    %178 = vmatpush.msra.mxu0 0.0
    %179 = vmatpush.msra.mxu0 0.0
    %180 = vmatpush.msra.mxu0 0.0
    %181 = vmatpush.msra.mxu0 0.0
    %182 = vmatpush.msra.mxu0 0.0
    %183 = vmatpush.msra.mxu0 0.0
    %184 = vmatpush.msra.mxu0 %v158
    %185 = vmatpush.msra.mxu0 %v157
    %186 = vmatmul.f32.gmra.mxu0 %v168
    %v187 = vpop.f32.mrf.mxu0
    %v188 = vadd.f32 %v166, %v187
    %189 = vdwg.mxu0
    %vm190 = vcmask 57344
    %191 = vst.msk [vmem:[#allocation3] sm:$0x1] %vm190, %v188
    // Predicated region
    $region38: #{tpu_custom_call.1} parent=1 // pred_check
      _
    $region39: #{tpu_custom_call.1} parent=1 // pred_check_branch
      %193 = sbr.rel (0) target = $region41
    $region40: #{tpu_custom_call.1} parent=1 // pred_region
      %195 = vsyncadd [#allocation4], 0
      %s197 = sshll.u32 [#allocation3], 4
      %s198 = int_to_ptr.vmem [resolvable:$true] %s197
      %s199 = sshll.u32 %s9, 4
      %s200 = int_to_ptr.hbm [resolvable:$true] %s199
      %202 = dma.vmem_to_hbm [thread:$0]  %s198, 16, %s200, [#allocation4]
    $region41: #{tpu_custom_call.1} parent=1 // pred_fallthru
      _
    // Predicated region
    $region42: #{tpu_custom_call.1} parent=1 // pred_check
      _
    $region43: #{tpu_custom_call.1} parent=1 // pred_check_branch
      %204 = sbr.rel (0) target = $region45
    $region44: #{tpu_custom_call.1} parent=1 // pred_region
      %206 = dma.done [#allocation4], 16
    $region45: #{tpu_custom_call.1} parent=1 // pred_fallthru
      _
    %207 = vsyncpa [#allocation4], 1

</llo_original>
